<compile_context>
chip_gen: v5e
topology: v5e:2x2
jax: 0.10.0
libtpu: 0.0.40
codegen_flags: <defaults>
</compile_context>

<pallas_src>
import math
import functools

import jax
import jax.numpy as jnp
from jax.experimental import pallas as pl
from jax.experimental.pallas import tpu as pltpu


def _alibi_attn_kernel(x_ref, w_ref, slopes_ref, o_ref, *,
                       num_heads, inv_scale, mxu_dtype):
    H = num_heads
    x = x_ref[...]                                  # (TB, S, D) block of batch rows
    TB, S, D = x.shape
    Dh = D // H

    # --- Fused K|Q|V projection: ONE wide MXU matmul, M = TB*S rows. ---------
    x2 = x.reshape(TB * S, D).astype(mxu_dtype)      # free collapse (S % 8 == 0)
    w = w_ref[...].astype(mxu_dtype)                 # (D, 3D), cols = [K | Q | V]
    kqv = jnp.dot(x2, w, preferred_element_type=jnp.float32)   # (TB*S, 3D) f32 acc
    kqv = kqv.reshape(TB, S, 3 * D)

    k_all = kqv[:, :, :D]                            # (TB, S, D)
    q_all = kqv[:, :, D:2 * D] * inv_scale           # fold 1/sqrt(d_model) into Q
    v_all = kqv[:, :, 2 * D:]

    # --- Relative positions / causal mask, shared by all heads & rows. ------
    row = jax.lax.broadcasted_iota(jnp.int32, (S, S), 0)
    col = jax.lax.broadcasted_iota(jnp.int32, (S, S), 1)
    rel = (col - row).astype(jnp.float32)            # rel[i, j] = j - i
    causal = rel <= 0.0                              # lower-triangular (incl. diag)

    # --- Per-head attention, batched over the TB folded batch rows. ---------
    # H is a compile-time constant (short static loop); each head writes its
    # own output slab directly -- no list accumulation, no concatenate.
    for h in range(H):
        q_h = q_all[:, :, h * Dh:(h + 1) * Dh]       # (TB, S, Dh)
        k_h = k_all[:, :, h * Dh:(h + 1) * Dh]
        v_h = v_all[:, :, h * Dh:(h + 1) * Dh]
        slope = slopes_ref[h]                        # scalar from SMEM

        # Q K^T contracting Dh directly (no explicit k.T / XLU transpose).
        score = jnp.einsum('bqd,bkd->bqk',
                           q_h.astype(mxu_dtype), k_h.astype(mxu_dtype),
                           preferred_element_type=jnp.float32)   # (TB, S, S)
        # Fused ALiBi bias + causal mask (diagonal always unmasked -> denom > 0).
        score = jnp.where(causal, score + slope * rel, -jnp.inf)

        # Softmax over keys, all in f32.
        m = jnp.max(score, axis=-1, keepdims=True)
        e = jnp.exp(score - m)
        denom = jnp.sum(e, axis=-1, keepdims=True)
        inv_denom = pl.reciprocal(denom, approx=False)   # exact, for parity

        # Normalize AFTER the value matmul: (S, Dh) multiplies, not (S, S).
        ctx = jnp.einsum('bqk,bkd->bqd',
                         e.astype(mxu_dtype), v_h.astype(mxu_dtype),
                         preferred_element_type=jnp.float32) * inv_denom
        # Direct static-slice store of this head's slab into the output block.
        o_ref[:, :, h * Dh:(h + 1) * Dh] = ctx.astype(o_ref.dtype)


def prepare_alibi_weights(w_kqv):
    """One-time (parameter-load time) prep: (3D, D) PyTorch weight -> (D, 3D).

    Done once outside the forward path so no per-call weight transpose/HBM
    round trip is paid.
    """
    return jnp.transpose(w_kqv, (1, 0))


def get_alibi_slopes(num_heads):
    x = 256.0 ** (1.0 / num_heads)
    return jnp.asarray([1.0 / x ** (i + 1) for i in range(num_heads)],
                       dtype=jnp.float32)


def _choose_block_batch(batch, seq_len, target_rows=256):
    """Fold enough batch rows per grid step so the projection M-dim ~= 256."""
    tb = min(batch, max(1, target_rows // max(seq_len, 1)))
    while batch % tb:
        tb -= 1
    return tb


def alibi_mha_forward(x, w_kqv_t, slopes, num_heads, *,
                      mxu_dtype=jnp.float32, block_batch=None):
    """Pallas ALiBiMultiHeadAttention.forward (attention_mask=None, eval mode).

    x:       (B, S, D) float32
    w_kqv_t: (D, 3*D) float32 -- pre-transposed kqv weight (prepare_alibi_weights)
    slopes:  (num_heads,) float32 ALiBi slopes (get_alibi_slopes)
    """
    B, S, D = x.shape
    H = num_heads
    assert D % H == 0, "d_model must be divisible by num_heads"
    assert w_kqv_t.shape == (D, 3 * D), "pass the pre-transposed (D, 3D) weight"
    inv_scale = 1.0 / math.sqrt(D)

    TB = block_batch if block_batch is not None else _choose_block_batch(B, S)
    assert B % TB == 0

    # NOTE: at production batch sizes the grid has many "parallel" steps (keeps
    # both v7x TensorCores busy); the weight block index is constant across the
    # grid so the pipeline never re-copies it.  At real d_model it should also
    # be single-buffered (see TODO at top).
    out = pl.pallas_call(
        functools.partial(_alibi_attn_kernel, num_heads=H,
                          inv_scale=inv_scale, mxu_dtype=mxu_dtype),
        out_shape=jax.ShapeDtypeStruct((B, S, D), x.dtype),
        grid=(B // TB,),
        in_specs=[
            pl.BlockSpec((TB, S, D), lambda b: (b, 0, 0)),      # x: TB batch rows
            pl.BlockSpec((D, 3 * D), lambda b: (0, 0)),         # fused KQV weight
            pl.BlockSpec(memory_space=pltpu.MemorySpace.SMEM),  # ALiBi slopes
        ],
        out_specs=pl.BlockSpec((TB, S, D), lambda b: (b, 0, 0)),
        compiler_params=pltpu.CompilerParams(
            dimension_semantics=("parallel",)),
    )(x, w_kqv_t, slopes)
    return out


def alibi_mha_reference(x, w_kqv, num_heads):
    """Pure-JAX reference mirroring the PyTorch module (f32-accurate matmuls)."""
    with jax.default_matmul_precision("highest"):
        B, S, D = x.shape
        H = num_heads
        Dh = D // H
        kqv = x @ w_kqv.T
        key, query, value = jnp.split(kqv, 3, axis=-1)
        key = key.reshape(B, S, H, Dh).transpose(0, 2, 3, 1)      # (B, H, Dh, S)
        query = query.reshape(B, S, H, Dh).transpose(0, 2, 1, 3)  # (B, H, S, Dh)
        value = value.reshape(B, S, H, Dh).transpose(0, 2, 1, 3)  # (B, H, S, Dh)
        xh = 256.0 ** (1.0 / H)
        slopes = jnp.asarray([1.0 / xh ** (i + 1) for i in range(H)],
                             dtype=jnp.float32)[:, None, None]
        rel = (jnp.arange(S)[None, :] - jnp.arange(S)[:, None]).astype(jnp.float32)
        bias = (slopes * rel)[None]                               # (1, H, S, S)
        score = query @ key / math.sqrt(D) + bias
        mask = jnp.tril(jnp.ones((S, S), dtype=jnp.float32))
        score = jnp.where(mask[None, None] == 0, -jnp.inf, score)
        attn = jax.nn.softmax(score, axis=-1)
        out = attn @ value
        return out.transpose(0, 2, 1, 3).reshape(B, S, D)


if __name__ == "__main__":
    # Small, module-consistent shapes: d_model=32, num_heads=4 -> head_dim=8.
    B, S, D, H = 2, 8, 32, 4

    key = jax.random.PRNGKey(0)
    kx, kw = jax.random.split(key)
    x = jax.random.normal(kx, (B, S, D), dtype=jnp.float32)
    # nn.Linear(d_model, 3*d_model, bias=False).weight: (3*D, D)
    w_kqv = jax.random.normal(kw, (3 * D, D), dtype=jnp.float32) * (1.0 / math.sqrt(D))

    # One-time parameter preparation (outside the forward path).
    w_t = prepare_alibi_weights(w_kqv)
    slopes = get_alibi_slopes(H)

    # f32 MXU path (default): tight parity with the reference.
    fwd = jax.jit(functools.partial(alibi_mha_forward, num_heads=H))
    out = jax.block_until_ready(fwd(x, w_t, slopes))

    ref = alibi_mha_reference(x, w_kqv, H)
    assert out.shape == (B, S, D)
    assert jnp.allclose(out, ref, rtol=5e-4, atol=5e-4), "mismatch vs reference (f32 path)"

    # Production-recommended MXU dtype: bf16 operands, f32 accumulate, f32 softmax.
    fwd_bf16 = jax.jit(functools.partial(alibi_mha_forward, num_heads=H,
                                         mxu_dtype=jnp.bfloat16))
    out_bf16 = jax.block_until_ready(fwd_bf16(x, w_t, slopes))
    assert jnp.allclose(out_bf16, ref, rtol=1e-1, atol=1e-1), "bf16 MXU path sanity check"

    print("KERNEL_OK")
</pallas_src>

<mosaic_0001>
module attributes {stable_mosaic.version = 11 : i64} {
  func.func @_alibi_attn_kernel(%arg0: i32, %arg1: memref<2x8x32xf32, #tpu.memory_space<vmem>>, %arg2: memref<32x96xf32, #tpu.memory_space<vmem>>, %arg3: memref<4xf32, #tpu.memory_space<smem>>, %arg4: memref<2x8x32xf32, #tpu.memory_space<vmem>>) attributes {dimension_semantics = [#tpu.dimension_semantics<parallel>], iteration_bounds = array<i64: 1>, scalar_prefetch = 0 : i64, scratch_operands = 0 : i64, tpu.core_type = #tpu.core_type<tc>, window_params = [{transform_indices = @transform_0, window_bounds = array<i64: 2, 8, 32>}, {pipeline_mode = #tpu.pipeline_mode<synchronous>, transform_indices = @transform_1, window_bounds = array<i64: 32, 96>}, {transform_indices = @transform_2, window_bounds = array<i64: 4>}, {transform_indices = @transform_3, window_bounds = array<i64: 2, 8, 32>}]} {
    %c0 = arith.constant 0 : index
    %c0_0 = arith.constant 0 : index
    %c0_1 = arith.constant 0 : index
    %0 = vector.load %arg1[%c0, %c0_0, %c0_1] : memref<2x8x32xf32, #tpu.memory_space<vmem>>, vector<2x8x32xf32>
    %1 = vector.shape_cast %0 : vector<2x8x32xf32> to vector<16x32xf32>
    %c0_2 = arith.constant 0 : index
    %c0_3 = arith.constant 0 : index
    %2 = vector.load %arg2[%c0_2, %c0_3] : memref<32x96xf32, #tpu.memory_space<vmem>>, vector<32x96xf32>
    %cst = arith.constant dense<0.000000e+00> : vector<16x96xf32>
    %3 = tpu.matmul %1, %2, %cst {dimension_numbers = #tpu.dot_dimension_numbers<[1], [0], [0], [1], [0, 0, 1, 1], [], []>} : vector<16x32xf32>, vector<32x96xf32>, vector<16x96xf32> -> vector<16x96xf32>
    %4 = vector.shape_cast %3 : vector<16x96xf32> to vector<2x8x96xf32>
    %5 = vector.extract_strided_slice %4 {offsets = [0, 0, 0], sizes = [2, 8, 32], strides = [1, 1, 1]} : vector<2x8x96xf32> to vector<2x8x32xf32>
    %6 = vector.extract_strided_slice %4 {offsets = [0, 0, 32], sizes = [2, 8, 32], strides = [1, 1, 1]} : vector<2x8x96xf32> to vector<2x8x32xf32>
    %cst_4 = arith.constant 0.176776692 : f32
    %7 = vector.broadcast %cst_4 : f32 to vector<2x8x32xf32>
    %8 = arith.mulf %6, %7 : vector<2x8x32xf32>
    %9 = vector.extract_strided_slice %4 {offsets = [0, 0, 64], sizes = [2, 8, 32], strides = [1, 1, 1]} : vector<2x8x96xf32> to vector<2x8x32xf32>
    %10 = tpu.iota {dimensions = array<i32: 0>} : vector<8x8xi32>
    %11 = tpu.iota {dimensions = array<i32: 1>} : vector<8x8xi32>
    %12 = arith.subi %11, %10 : vector<8x8xi32>
    %13 = arith.sitofp %12 : vector<8x8xi32> to vector<8x8xf32>
    %cst_5 = arith.constant 0.000000e+00 : f32
    %14 = vector.broadcast %cst_5 : f32 to vector<8x8xf32>
    %15 = arith.cmpf ole, %13, %14 : vector<8x8xf32>
    %16 = vector.extract_strided_slice %8 {offsets = [0, 0, 0], sizes = [2, 8, 8], strides = [1, 1, 1]} : vector<2x8x32xf32> to vector<2x8x8xf32>
    %17 = vector.extract_strided_slice %5 {offsets = [0, 0, 0], sizes = [2, 8, 8], strides = [1, 1, 1]} : vector<2x8x32xf32> to vector<2x8x8xf32>
    %18 = vector.extract_strided_slice %9 {offsets = [0, 0, 0], sizes = [2, 8, 8], strides = [1, 1, 1]} : vector<2x8x32xf32> to vector<2x8x8xf32>
    %c0_6 = arith.constant 0 : index
    %19 = memref.load %arg3[%c0_6] : memref<4xf32, #tpu.memory_space<smem>>
    "tpu.trace_start"() <{level = 10 : i32, message = "bqd,bkd->bqk"}> : () -> ()
    %cst_7 = arith.constant dense<0.000000e+00> : vector<2x8x8xf32>
    %20 = tpu.matmul %16, %17, %cst_7 {dimension_numbers = #tpu.dot_dimension_numbers<[2], [2], [1], [1], [0, 0, 0, 1, 1, 1], [0], [0]>} : vector<2x8x8xf32>, vector<2x8x8xf32>, vector<2x8x8xf32> -> vector<2x8x8xf32>
    "tpu.trace_stop"() : () -> ()
    %21 = vector.broadcast %19 : f32 to vector<8x8xf32>
    %22 = arith.mulf %21, %13 : vector<8x8xf32>
    %23 = vector.shape_cast %22 : vector<8x8xf32> to vector<1x8x8xf32>
    %24 = vector.broadcast %23 : vector<1x8x8xf32> to vector<2x8x8xf32>
    %25 = arith.addf %20, %24 : vector<2x8x8xf32>
    %cst_8 = arith.constant 0xFF800000 : f32
    %26 = vector.shape_cast %15 : vector<8x8xi1> to vector<1x8x8xi1>
    %27 = vector.broadcast %26 : vector<1x8x8xi1> to vector<2x8x8xi1>
    %28 = vector.broadcast %cst_8 : f32 to vector<2x8x8xf32>
    %29 = arith.select %27, %25, %28 : vector<2x8x8xi1>, vector<2x8x8xf32>
    %cst_9 = arith.constant dense<0xFF800000> : vector<2x8xf32>
    %30 = vector.multi_reduction <maximumf>, %29, %cst_9 [2] : vector<2x8x8xf32> to vector<2x8xf32>
    %31 = vector.shape_cast %30 : vector<2x8xf32> to vector<2x8x1xf32>
    %32 = vector.broadcast %31 : vector<2x8x1xf32> to vector<2x8x8xf32>
    %33 = arith.subf %29, %32 : vector<2x8x8xf32>
    %34 = math.exp %33 : vector<2x8x8xf32>
    %cst_10 = arith.constant dense<0.000000e+00> : vector<2x8xf32>
    %35 = vector.multi_reduction <add>, %34, %cst_10 [2] : vector<2x8x8xf32> to vector<2x8xf32>
    %36 = vector.shape_cast %35 : vector<2x8xf32> to vector<2x8x1xf32>
    %37 = tpu.reciprocal %36 : vector<2x8x1xf32> -> vector<2x8x1xf32>
    "tpu.trace_start"() <{level = 10 : i32, message = "bqk,bkd->bqd"}> : () -> ()
    %cst_11 = arith.constant dense<0.000000e+00> : vector<2x8x8xf32>
    %38 = tpu.matmul %34, %18, %cst_11 {dimension_numbers = #tpu.dot_dimension_numbers<[2], [1], [1], [2], [0, 0, 0, 1, 1, 2], [0], [0]>} : vector<2x8x8xf32>, vector<2x8x8xf32>, vector<2x8x8xf32> -> vector<2x8x8xf32>
    "tpu.trace_stop"() : () -> ()
    %39 = vector.broadcast %37 : vector<2x8x1xf32> to vector<2x8x8xf32>
    %40 = arith.mulf %38, %39 : vector<2x8x8xf32>
    %c0_12 = arith.constant 0 : index
    %c0_13 = arith.constant 0 : index
    %c0_14 = arith.constant 0 : index
    %41 = vector.load %arg4[%c0_12, %c0_13, %c0_14] : memref<2x8x32xf32, #tpu.memory_space<vmem>>, vector<2x8x8xf32>
    tpu.vector_store %arg4[%c0_12, %c0_13, %c0_14], %40 {strides = array<i32>} : memref<2x8x32xf32, #tpu.memory_space<vmem>>, vector<2x8x8xf32>,
    %42 = vector.extract_strided_slice %8 {offsets = [0, 0, 8], sizes = [2, 8, 8], strides = [1, 1, 1]} : vector<2x8x32xf32> to vector<2x8x8xf32>
    %43 = vector.extract_strided_slice %5 {offsets = [0, 0, 8], sizes = [2, 8, 8], strides = [1, 1, 1]} : vector<2x8x32xf32> to vector<2x8x8xf32>
    %44 = vector.extract_strided_slice %9 {offsets = [0, 0, 8], sizes = [2, 8, 8], strides = [1, 1, 1]} : vector<2x8x32xf32> to vector<2x8x8xf32>
    %c1 = arith.constant 1 : index
    %45 = memref.load %arg3[%c1] : memref<4xf32, #tpu.memory_space<smem>>
    "tpu.trace_start"() <{level = 10 : i32, message = "bqd,bkd->bqk"}> : () -> ()
    %cst_15 = arith.constant dense<0.000000e+00> : vector<2x8x8xf32>
    %46 = tpu.matmul %42, %43, %cst_15 {dimension_numbers = #tpu.dot_dimension_numbers<[2], [2], [1], [1], [0, 0, 0, 1, 1, 1], [0], [0]>} : vector<2x8x8xf32>, vector<2x8x8xf32>, vector<2x8x8xf32> -> vector<2x8x8xf32>
    "tpu.trace_stop"() : () -> ()
    %47 = vector.broadcast %45 : f32 to vector<8x8xf32>
    %48 = arith.mulf %47, %13 : vector<8x8xf32>
    %49 = vector.shape_cast %48 : vector<8x8xf32> to vector<1x8x8xf32>
    %50 = vector.broadcast %49 : vector<1x8x8xf32> to vector<2x8x8xf32>
    %51 = arith.addf %46, %50 : vector<2x8x8xf32>
    %cst_16 = arith.constant 0xFF800000 : f32
    %52 = vector.shape_cast %15 : vector<8x8xi1> to vector<1x8x8xi1>
    %53 = vector.broadcast %52 : vector<1x8x8xi1> to vector<2x8x8xi1>
    %54 = vector.broadcast %cst_16 : f32 to vector<2x8x8xf32>
    %55 = arith.select %53, %51, %54 : vector<2x8x8xi1>, vector<2x8x8xf32>
    %cst_17 = arith.constant dense<0xFF800000> : vector<2x8xf32>
    %56 = vector.multi_reduction <maximumf>, %55, %cst_17 [2] : vector<2x8x8xf32> to vector<2x8xf32>
    %57 = vector.shape_cast %56 : vector<2x8xf32> to vector<2x8x1xf32>
    %58 = vector.broadcast %57 : vector<2x8x1xf32> to vector<2x8x8xf32>
    %59 = arith.subf %55, %58 : vector<2x8x8xf32>
    %60 = math.exp %59 : vector<2x8x8xf32>
    %cst_18 = arith.constant dense<0.000000e+00> : vector<2x8xf32>
    %61 = vector.multi_reduction <add>, %60, %cst_18 [2] : vector<2x8x8xf32> to vector<2x8xf32>
    %62 = vector.shape_cast %61 : vector<2x8xf32> to vector<2x8x1xf32>
    %63 = tpu.reciprocal %62 : vector<2x8x1xf32> -> vector<2x8x1xf32>
    "tpu.trace_start"() <{level = 10 : i32, message = "bqk,bkd->bqd"}> : () -> ()
    %cst_19 = arith.constant dense<0.000000e+00> : vector<2x8x8xf32>
    %64 = tpu.matmul %60, %44, %cst_19 {dimension_numbers = #tpu.dot_dimension_numbers<[2], [1], [1], [2], [0, 0, 0, 1, 1, 2], [0], [0]>} : vector<2x8x8xf32>, vector<2x8x8xf32>, vector<2x8x8xf32> -> vector<2x8x8xf32>
    "tpu.trace_stop"() : () -> ()
    %65 = vector.broadcast %63 : vector<2x8x1xf32> to vector<2x8x8xf32>
    %66 = arith.mulf %64, %65 : vector<2x8x8xf32>
    %c0_20 = arith.constant 0 : index
    %c0_21 = arith.constant 0 : index
    %c8 = arith.constant 8 : index
    %67 = vector.load %arg4[%c0_20, %c0_21, %c8] : memref<2x8x32xf32, #tpu.memory_space<vmem>>, vector<2x8x8xf32>
    tpu.vector_store %arg4[%c0_20, %c0_21, %c8], %66 {strides = array<i32>} : memref<2x8x32xf32, #tpu.memory_space<vmem>>, vector<2x8x8xf32>,
    %68 = vector.extract_strided_slice %8 {offsets = [0, 0, 16], sizes = [2, 8, 8], strides = [1, 1, 1]} : vector<2x8x32xf32> to vector<2x8x8xf32>
    %69 = vector.extract_strided_slice %5 {offsets = [0, 0, 16], sizes = [2, 8, 8], strides = [1, 1, 1]} : vector<2x8x32xf32> to vector<2x8x8xf32>
    %70 = vector.extract_strided_slice %9 {offsets = [0, 0, 16], sizes = [2, 8, 8], strides = [1, 1, 1]} : vector<2x8x32xf32> to vector<2x8x8xf32>
    %c2 = arith.constant 2 : index
    %71 = memref.load %arg3[%c2] : memref<4xf32, #tpu.memory_space<smem>>
    "tpu.trace_start"() <{level = 10 : i32, message = "bqd,bkd->bqk"}> : () -> ()
    %cst_22 = arith.constant dense<0.000000e+00> : vector<2x8x8xf32>
    %72 = tpu.matmul %68, %69, %cst_22 {dimension_numbers = #tpu.dot_dimension_numbers<[2], [2], [1], [1], [0, 0, 0, 1, 1, 1], [0], [0]>} : vector<2x8x8xf32>, vector<2x8x8xf32>, vector<2x8x8xf32> -> vector<2x8x8xf32>
    "tpu.trace_stop"() : () -> ()
    %73 = vector.broadcast %71 : f32 to vector<8x8xf32>
    %74 = arith.mulf %73, %13 : vector<8x8xf32>
    %75 = vector.shape_cast %74 : vector<8x8xf32> to vector<1x8x8xf32>
    %76 = vector.broadcast %75 : vector<1x8x8xf32> to vector<2x8x8xf32>
    %77 = arith.addf %72, %76 : vector<2x8x8xf32>
    %cst_23 = arith.constant 0xFF800000 : f32
    %78 = vector.shape_cast %15 : vector<8x8xi1> to vector<1x8x8xi1>
    %79 = vector.broadcast %78 : vector<1x8x8xi1> to vector<2x8x8xi1>
    %80 = vector.broadcast %cst_23 : f32 to vector<2x8x8xf32>
    %81 = arith.select %79, %77, %80 : vector<2x8x8xi1>, vector<2x8x8xf32>
    %cst_24 = arith.constant dense<0xFF800000> : vector<2x8xf32>
    %82 = vector.multi_reduction <maximumf>, %81, %cst_24 [2] : vector<2x8x8xf32> to vector<2x8xf32>
    %83 = vector.shape_cast %82 : vector<2x8xf32> to vector<2x8x1xf32>
    %84 = vector.broadcast %83 : vector<2x8x1xf32> to vector<2x8x8xf32>
    %85 = arith.subf %81, %84 : vector<2x8x8xf32>
    %86 = math.exp %85 : vector<2x8x8xf32>
    %cst_25 = arith.constant dense<0.000000e+00> : vector<2x8xf32>
    %87 = vector.multi_reduction <add>, %86, %cst_25 [2] : vector<2x8x8xf32> to vector<2x8xf32>
    %88 = vector.shape_cast %87 : vector<2x8xf32> to vector<2x8x1xf32>
    %89 = tpu.reciprocal %88 : vector<2x8x1xf32> -> vector<2x8x1xf32>
    "tpu.trace_start"() <{level = 10 : i32, message = "bqk,bkd->bqd"}> : () -> ()
    %cst_26 = arith.constant dense<0.000000e+00> : vector<2x8x8xf32>
    %90 = tpu.matmul %86, %70, %cst_26 {dimension_numbers = #tpu.dot_dimension_numbers<[2], [1], [1], [2], [0, 0, 0, 1, 1, 2], [0], [0]>} : vector<2x8x8xf32>, vector<2x8x8xf32>, vector<2x8x8xf32> -> vector<2x8x8xf32>
    "tpu.trace_stop"() : () -> ()
    %91 = vector.broadcast %89 : vector<2x8x1xf32> to vector<2x8x8xf32>
    %92 = arith.mulf %90, %91 : vector<2x8x8xf32>
    %c0_27 = arith.constant 0 : index
    %c0_28 = arith.constant 0 : index
    %c16 = arith.constant 16 : index
    %93 = vector.load %arg4[%c0_27, %c0_28, %c16] : memref<2x8x32xf32, #tpu.memory_space<vmem>>, vector<2x8x8xf32>
    tpu.vector_store %arg4[%c0_27, %c0_28, %c16], %92 {strides = array<i32>} : memref<2x8x32xf32, #tpu.memory_space<vmem>>, vector<2x8x8xf32>,
    %94 = vector.extract_strided_slice %8 {offsets = [0, 0, 24], sizes = [2, 8, 8], strides = [1, 1, 1]} : vector<2x8x32xf32> to vector<2x8x8xf32>
    %95 = vector.extract_strided_slice %5 {offsets = [0, 0, 24], sizes = [2, 8, 8], strides = [1, 1, 1]} : vector<2x8x32xf32> to vector<2x8x8xf32>
    %96 = vector.extract_strided_slice %9 {offsets = [0, 0, 24], sizes = [2, 8, 8], strides = [1, 1, 1]} : vector<2x8x32xf32> to vector<2x8x8xf32>
    %c3 = arith.constant 3 : index
    %97 = memref.load %arg3[%c3] : memref<4xf32, #tpu.memory_space<smem>>
    "tpu.trace_start"() <{level = 10 : i32, message = "bqd,bkd->bqk"}> : () -> ()
    %cst_29 = arith.constant dense<0.000000e+00> : vector<2x8x8xf32>
    %98 = tpu.matmul %94, %95, %cst_29 {dimension_numbers = #tpu.dot_dimension_numbers<[2], [2], [1], [1], [0, 0, 0, 1, 1, 1], [0], [0]>} : vector<2x8x8xf32>, vector<2x8x8xf32>, vector<2x8x8xf32> -> vector<2x8x8xf32>
    "tpu.trace_stop"() : () -> ()
    %99 = vector.broadcast %97 : f32 to vector<8x8xf32>
    %100 = arith.mulf %99, %13 : vector<8x8xf32>
    %101 = vector.shape_cast %100 : vector<8x8xf32> to vector<1x8x8xf32>
    %102 = vector.broadcast %101 : vector<1x8x8xf32> to vector<2x8x8xf32>
    %103 = arith.addf %98, %102 : vector<2x8x8xf32>
    %cst_30 = arith.constant 0xFF800000 : f32
    %104 = vector.shape_cast %15 : vector<8x8xi1> to vector<1x8x8xi1>
    %105 = vector.broadcast %104 : vector<1x8x8xi1> to vector<2x8x8xi1>
    %106 = vector.broadcast %cst_30 : f32 to vector<2x8x8xf32>
    %107 = arith.select %105, %103, %106 : vector<2x8x8xi1>, vector<2x8x8xf32>
    %cst_31 = arith.constant dense<0xFF800000> : vector<2x8xf32>
    %108 = vector.multi_reduction <maximumf>, %107, %cst_31 [2] : vector<2x8x8xf32> to vector<2x8xf32>
    %109 = vector.shape_cast %108 : vector<2x8xf32> to vector<2x8x1xf32>
    %110 = vector.broadcast %109 : vector<2x8x1xf32> to vector<2x8x8xf32>
    %111 = arith.subf %107, %110 : vector<2x8x8xf32>
    %112 = math.exp %111 : vector<2x8x8xf32>
    %cst_32 = arith.constant dense<0.000000e+00> : vector<2x8xf32>
    %113 = vector.multi_reduction <add>, %112, %cst_32 [2] : vector<2x8x8xf32> to vector<2x8xf32>
    %114 = vector.shape_cast %113 : vector<2x8xf32> to vector<2x8x1xf32>
    %115 = tpu.reciprocal %114 : vector<2x8x1xf32> -> vector<2x8x1xf32>
    "tpu.trace_start"() <{level = 10 : i32, message = "bqk,bkd->bqd"}> : () -> ()
    %cst_33 = arith.constant dense<0.000000e+00> : vector<2x8x8xf32>
    %116 = tpu.matmul %112, %96, %cst_33 {dimension_numbers = #tpu.dot_dimension_numbers<[2], [1], [1], [2], [0, 0, 0, 1, 1, 2], [0], [0]>} : vector<2x8x8xf32>, vector<2x8x8xf32>, vector<2x8x8xf32> -> vector<2x8x8xf32>
    "tpu.trace_stop"() : () -> ()
    %117 = vector.broadcast %115 : vector<2x8x1xf32> to vector<2x8x8xf32>
    %118 = arith.mulf %116, %117 : vector<2x8x8xf32>
    %c0_34 = arith.constant 0 : index
    %c0_35 = arith.constant 0 : index
    %c24 = arith.constant 24 : index
    %119 = vector.load %arg4[%c0_34, %c0_35, %c24] : memref<2x8x32xf32, #tpu.memory_space<vmem>>, vector<2x8x8xf32>
    tpu.vector_store %arg4[%c0_34, %c0_35, %c24], %118 {strides = array<i32>} : memref<2x8x32xf32, #tpu.memory_space<vmem>>, vector<2x8x8xf32>,
    return
  }
  func.func @transform_0(%arg0: i32) -> (i32, i32, i32) {
    %c0_i32 = arith.constant 0 : i32
    %c0_i32_0 = arith.constant 0 : i32
    %c0_i32_1 = arith.constant 0 : i32
    return %arg0, %c0_i32, %c0_i32_0 : i32, i32, i32
  }
  func.func @transform_1(%arg0: i32) -> (i32, i32) {
    %c0_i32 = arith.constant 0 : i32
    %c0_i32_0 = arith.constant 0 : i32
    %c0_i32_1 = arith.constant 0 : i32
    return %c0_i32, %c0_i32_0 : i32, i32
  }
  func.func @transform_2(%arg0: i32) -> i32 {
    %c0_i32 = arith.constant 0 : i32
    %c0_i32_0 = arith.constant 0 : i32
    return %c0_i32 : i32
  }
  func.func @transform_3(%arg0: i32) -> (i32, i32, i32) {
    %c0_i32 = arith.constant 0 : i32
    %c0_i32_0 = arith.constant 0 : i32
    %c0_i32_1 = arith.constant 0 : i32
    return %arg0, %c0_i32, %c0_i32_0 : i32, i32, i32
  }
}

</mosaic_0001>

<llo_original>
// kernel: alibi_mha_forward.1
$region0: #{alibi_mha_forward.1}
  #allocation0 [shape = 'u32[]', space=smem, size = 0x4, offset = 0x4, fixed_abs, tag = 'smem constant byte address 0x4 - core index']
  #allocation1 [shape = 'u32[72,128]{1,0:T(1,128)}', space=vmem, size = 0x9000, scoped, tag = 'internal scratch']
  %s0 = inlined_call_operand.hbm [shape: f32[2,8,32], index: 0, kind: input, shape index: {}]
  %s1 = inlined_call_operand.hbm [shape: f32[32,96], index: 1, kind: input, shape index: {}]
  %s2 = inlined_call_operand.vmem [shape: f32[4], index: 2, kind: input, shape index: {}]
  %s3 = inlined_call_operand.hbm [shape: f32[2,8,32], index: 3, kind: output, shape index: {}]
  %s4 = sld [smem:[#allocation0]]
  $region34: #{alibi_mha_forward.1} parent=0
    _
  %s6 = ssub.s32 1, %s4
  %s7 = scalar_select 0, %s6, %s4
  $region1: #{alibi_mha_forward.1} parent=0
    #allocation2 [shape = 'u8[8192]{0}', space=vmem, size = 0x2000, scoped, tag = 'input window, operand 0, single buffered']
    #allocation3 [shape = 's32[1]{0}', space=sflag, size = 0x4, scoped, tag = 'scoped memory for alibi_mha_forward.1']
    #allocation4 [shape = 's32[1]{0}', space=sflag, size = 0x4, scoped, tag = 'scoped memory for alibi_mha_forward.1']
    #allocation5 [shape = 's32[1]{0}', space=sflag, size = 0x4, scoped, tag = 'scoped memory for alibi_mha_forward.1']
    #allocation6 [shape = 'u8[16384]{0}', space=vmem, size = 0x4000, scoped, tag = 'input window, operand 1, single buffered']
    #allocation7 [shape = 's32[1]{0}', space=sflag, size = 0x4, scoped, tag = 'scoped memory for alibi_mha_forward.1']
    #allocation8 [shape = 'u8[512]{0}', space=smem, size = 0x200, scoped, tag = 'input window, operand 2, single buffered']
    #allocation9 [shape = 'u8[8192]{0}', space=vmem, size = 0x2000, scoped, tag = 'output window, operand 0, single buffered']
    %8 = vsyncpa [#allocation3], 0
    %9 = vsyncpa [#allocation7], 0
    %10 = vsyncpa [#allocation5], 0
    %11 = vsyncpa [#allocation4], 0
    // Predicated region
    $region2: #{alibi_mha_forward.1} parent=1 // pred_check
      _
    $region3: #{alibi_mha_forward.1} parent=1 // pred_check_branch
      %13 = sbr.rel (0) target = $region5
    $region4: #{alibi_mha_forward.1} parent=1 // pred_region
      %15 = vsyncadd [#allocation3], 0
      %s16 = sshll.u32 %s0, 4
      %s17 = int_to_ptr.hbm [resolvable:$true] %s16
      %s18 = sshll.u32 [#allocation2], 4
      %s19 = int_to_ptr.vmem [resolvable:$true] %s18
      %24 = dma.hbm_to_vmem [thread:$0]  %s17, 256, %s19, [#allocation3], 128, 128, 8
    $region5: #{alibi_mha_forward.1} parent=1 // pred_fallthru
      _
    // Predicated region
    $region6: #{alibi_mha_forward.1} parent=1 // pred_check
      _
    $region7: #{alibi_mha_forward.1} parent=1 // pred_check_branch
      %26 = sbr.rel (0) target = $region9
    $region8: #{alibi_mha_forward.1} parent=1 // pred_region
      %28 = vsyncadd [#allocation7], 0
      %s29 = sshll.u32 %s1, 4
      %s30 = int_to_ptr.hbm [resolvable:$true] %s29
      %s31 = sshll.u32 [#allocation6], 4
      %s32 = int_to_ptr.vmem [resolvable:$true] %s31
      %37 = dma.hbm_to_vmem [thread:$0]  %s30, 512, %s32, [#allocation7], 128, 128, 8
    $region9: #{alibi_mha_forward.1} parent=1 // pred_fallthru
      _
    // Predicated region
    $region10: #{alibi_mha_forward.1} parent=1 // pred_check
      _
    $region11: #{alibi_mha_forward.1} parent=1 // pred_check_branch
      %39 = sbr.rel (0) target = $region13
    $region12: #{alibi_mha_forward.1} parent=1 // pred_region
      %41 = vsyncadd [#allocation5], 0
      %s43 = sshll.u32 %s2, 4
      %s44 = int_to_ptr.vmem [resolvable:$true] %s43
      %46 = dma.vmem_to_smem %s44, 16, [#allocation8], [#allocation5]
    $region13: #{alibi_mha_forward.1} parent=1 // pred_fallthru
      _
    // Predicated region
    $region14: #{alibi_mha_forward.1} parent=1 // pred_check
      _
    $region15: #{alibi_mha_forward.1} parent=1 // pred_check_branch
      %48 = sbr.rel (0) target = $region17
    $region16: #{alibi_mha_forward.1} parent=1 // pred_region
      %50 = dma.done [#allocation3], 256
    $region17: #{alibi_mha_forward.1} parent=1 // pred_fallthru
      _
    // Predicated region
    $region18: #{alibi_mha_forward.1} parent=1 // pred_check
      _
    $region19: #{alibi_mha_forward.1} parent=1 // pred_check_branch
      %52 = sbr.rel (0) target = $region21
    $region20: #{alibi_mha_forward.1} parent=1 // pred_region
      %54 = dma.done [#allocation7], 512
    $region21: #{alibi_mha_forward.1} parent=1 // pred_fallthru
      _
    // Predicated region
    $region22: #{alibi_mha_forward.1} parent=1 // pred_check
      _
    $region23: #{alibi_mha_forward.1} parent=1 // pred_check_branch
      %56 = sbr.rel (0) target = $region25
    $region24: #{alibi_mha_forward.1} parent=1 // pred_region
      %58 = dma.done [#allocation5], 16
    $region25: #{alibi_mha_forward.1} parent=1 // pred_fallthru
      _
    %59 = sfence
    %v60 = vld [vmem:[#allocation2] sm:$0xff]
    %v61 = vld [vmem:[#allocation2 + $0x8] sm:$0xff]
    %v62 = vld [vmem:[#allocation6] sm:$0xff]
    %v63 = vld [vmem:[#allocation6 + $0x8] sm:$0xff]
    %v64 = vld [vmem:[#allocation6 + $0x10] sm:$0xff]
    %v65 = vld [vmem:[#allocation6 + $0x18] sm:$0xff]
    %vm66 = vcmask 261120
    %v68 = vsel %vm66, %v60, 0
    %v71 = vsel %vm66, %v61, 0
    %73 = vmatpush.msra.mxu0 0.0
    %74 = vmatpush.msra.mxu0 0.0
    %75 = vmatpush.msra.mxu0 0.0
    %76 = vmatpush.msra.mxu0 0.0
    %77 = vmatpush.msra.mxu0 0.0
    %78 = vmatpush.msra.mxu0 0.0
    %79 = vmatpush.msra.mxu0 0.0
    %80 = vmatpush.msra.mxu0 0.0
    %81 = vmatpush.msra.mxu0 0.0
    %82 = vmatpush.msra.mxu0 0.0
    %83 = vmatpush.msra.mxu0 0.0
    %84 = vmatpush.msra.mxu0 0.0
    %85 = vmatpush.msra.mxu0 %v65
    %86 = vmatpush.msra.mxu0 %v64
    %87 = vmatpush.msra.mxu0 %v63
    %88 = vmatpush.msra.mxu0 %v62
    %89 = vmatmul.f32.gmra.mxu0 %v68
    %v90 = vpop.f32.mrf.mxu0
    %v91 = vadd.f32 0.0, %v90
    %92 = vmatmul.f32.gmra.mxu0 %v71
    %v93 = vpop.f32.mrf.mxu0
    %v94 = vadd.f32 0.0, %v93
    %95 = vdwg.mxu0
    %v96 = vmul.f32 %v91, 0.17677669
    %v97 = vmul.f32 %v94, 0.17677669
    %v98 = vlaneseq
    %v99 = vshrl.u32 %v98, 7
    %v100 = vlaneseq
    %v101 = vand.u32 %v100, 127
    %v102 = vsub.s32 %v101, %v99
    %v103 = vcvt.s32.f32 %v102
    %vm104 = vcmp.le.f32.partialorder %v103, 0.0
    %s105 = sld [smem:[#allocation8]]
    %v106 = vstv %s105
    %v107 = vmul.f32 %v106, %v103
    %109 = vrot.lane.b32.xlu0 %v96, 96
    %v110 = vpop.permute.xlu0 %109
    %vm111 = vcmask 64512
    %v112 = vsel %vm111, %v110, 0
    %v115 = vsel %vm111, %v91, 0
    %117 = vmatpush.xpose.msra.mxu0 0.0
    %118 = vmatpush.xpose.msra.mxu0 0.0
    %119 = vmatpush.xpose.msra.mxu0 0.0
    %120 = vmatpush.xpose.msra.mxu0 0.0
    %121 = vmatpush.xpose.msra.mxu0 0.0
    %122 = vmatpush.xpose.msra.mxu0 0.0
    %123 = vmatpush.xpose.msra.mxu0 0.0
    %124 = vmatpush.xpose.msra.mxu0 0.0
    %125 = vmatpush.xpose.msra.mxu0 0.0
    %126 = vmatpush.xpose.msra.mxu0 0.0
    %127 = vmatpush.xpose.msra.mxu0 0.0
    %128 = vmatpush.xpose.msra.mxu0 0.0
    %129 = vmatpush.xpose.msra.mxu0 0.0
    %130 = vmatpush.xpose.msra.mxu0 0.0
    %131 = vmatpush.xpose.msra.mxu0 0.0
    %132 = vmatpush.xpose.msra.mxu0 %v115
    %133 = vmatmul.f32.gmra.mxu0 %v112
    %v134 = vpop.f32.mrf.mxu0
    %v135 = vadd.f32 %v107, %v134
    %136 = vdwg.mxu0
    %138 = vrot.lane.b32.xlu0 %v97, 96
    %v139 = vpop.permute.xlu0 %138
    %v140 = vsel %vm111, %v139, 0
    %v143 = vsel %vm111, %v94, 0
    %145 = vmatpush.xpose.msra.mxu0 0.0
    %146 = vmatpush.xpose.msra.mxu0 0.0
    %147 = vmatpush.xpose.msra.mxu0 0.0
    %148 = vmatpush.xpose.msra.mxu0 0.0
    %149 = vmatpush.xpose.msra.mxu0 0.0
    %150 = vmatpush.xpose.msra.mxu0 0.0
    %151 = vmatpush.xpose.msra.mxu0 0.0
    %152 = vmatpush.xpose.msra.mxu0 0.0
    %153 = vmatpush.xpose.msra.mxu0 0.0
    %154 = vmatpush.xpose.msra.mxu0 0.0
    %155 = vmatpush.xpose.msra.mxu0 0.0
    %156 = vmatpush.xpose.msra.mxu0 0.0
    %157 = vmatpush.xpose.msra.mxu0 0.0
    %158 = vmatpush.xpose.msra.mxu0 0.0
    %159 = vmatpush.xpose.msra.mxu0 0.0
    %160 = vmatpush.xpose.msra.mxu0 %v143
    %161 = vmatmul.f32.gmra.mxu0 %v140
    %v162 = vpop.f32.mrf.mxu0
    %v163 = vadd.f32 %v107, %v162
    %164 = vdwg.mxu0
    %v165 = vsel %vm104, 1, 0
    %vm166 = vcmp.eq.s32.totalorder %v165, 1
    %v167 = vsel %vm166, %v135, -inf
    %v168 = vsel %vm166, %v163, -inf
    %v169 = vsel %vm111, %v167, -inf
    %170 = vmax.xlane.f32.xlu0 %v169
    %v171 = vpop.xlane.xlu0 %170
    %v172 = vsel %vm111, %v168, -inf
    %173 = vmax.xlane.f32.xlu0 %v172
    %v174 = vpop.xlane.xlu0 %173
    %v175 = vsub.f32 %v167, %v171
    %v176 = vsub.f32 %v168, %v174
    %v177 = vmul.f32 %v175, 1.442695
    %v178 = vpow.pop %v177
    %v179 = vmul.f32 %v176, 1.442695
    %v180 = vpow.pop %v179
    %v181 = vsel %vm111, %v178, 0.0
    %182 = vadd.xlane.f32.xlu0 %v181
    %v183 = vpop.xlane.xlu0 %182
    %v184 = vsel %vm111, %v180, 0.0
    %185 = vadd.xlane.f32.xlu0 %v184
    %v186 = vpop.xlane.xlu0 %185
    %v187 = vrcp.pop %v183
    %v188 = vmul.f32 %v183, %v187
    %v189 = vsub.f32 1.0, %v188
    %v190 = vmul.f32 %v187, %v189
    %v191 = vadd.f32 %v187, %v190
    %vm192 = vweird.f32 %v183
    %vm193 = vweird.f32 %v187
    %vm194 = vmor %vm192, %vm193
    %v195 = vsel %vm194, %v187, %v191
    %v196 = vand.u32 2147483647, %v183
    %vm197 = vcmp.eq.f32.partialorder %v196, 8.507059e+37
    %v198 = vand.u32 %v183, 2147483648
    %v199 = vor.u32 1.1754944e-38, %v198
    %v200 = vsel %vm197, %v199, %v195
    %v201 = vrcp.pop %v186
    %v202 = vmul.f32 %v186, %v201
    %v203 = vsub.f32 1.0, %v202
    %v204 = vmul.f32 %v201, %v203
    %v205 = vadd.f32 %v201, %v204
    %vm206 = vweird.f32 %v186
    %vm207 = vweird.f32 %v201
    %vm208 = vmor %vm206, %vm207
    %v209 = vsel %vm208, %v201, %v205
    %v210 = vand.u32 2147483647, %v186
    %vm211 = vcmp.eq.f32.partialorder %v210, 8.507059e+37
    %v212 = vand.u32 %v186, 2147483648
    %v213 = vor.u32 1.1754944e-38, %v212
    %v214 = vsel %vm211, %v213, %v209
    %215 = vrot.lane.b32.xlu0 %v91, 64
    %v216 = vpop.permute.xlu0 %215
    %v219 = vsel %vm111, %v178, 0
    %221 = vmatpush.msra.mxu0 0.0
    %222 = vmatpush.msra.mxu0 0.0
    %223 = vmatpush.msra.mxu0 0.0
    %224 = vmatpush.msra.mxu0 0.0
    %225 = vmatpush.msra.mxu0 0.0
    %226 = vmatpush.msra.mxu0 0.0
    %227 = vmatpush.msra.mxu0 0.0
    %228 = vmatpush.msra.mxu0 0.0
    %229 = vmatpush.msra.mxu0 0.0
    %230 = vmatpush.msra.mxu0 0.0
    %231 = vmatpush.msra.mxu0 0.0
    %232 = vmatpush.msra.mxu0 0.0
    %233 = vmatpush.msra.mxu0 0.0
    %234 = vmatpush.msra.mxu0 0.0
    %235 = vmatpush.msra.mxu0 0.0
    %236 = vmatpush.msra.mxu0 %v216
    %237 = vmatmul.f32.gmra.mxu0 %v219
    %v238 = vpop.f32.mrf.mxu0
    %v239 = vadd.f32 0.0, %v238
    %240 = vdwg.mxu0
    %241 = vrot.lane.b32.xlu0 %v94, 64
    %v242 = vpop.permute.xlu0 %241
    %v245 = vsel %vm111, %v180, 0
    %247 = vmatpush.msra.mxu0 0.0
    %248 = vmatpush.msra.mxu0 0.0
    %249 = vmatpush.msra.mxu0 0.0
    %250 = vmatpush.msra.mxu0 0.0
    %251 = vmatpush.msra.mxu0 0.0
    %252 = vmatpush.msra.mxu0 0.0
    %253 = vmatpush.msra.mxu0 0.0
    %254 = vmatpush.msra.mxu0 0.0
    %255 = vmatpush.msra.mxu0 0.0
    %256 = vmatpush.msra.mxu0 0.0
    %257 = vmatpush.msra.mxu0 0.0
    %258 = vmatpush.msra.mxu0 0.0
    %259 = vmatpush.msra.mxu0 0.0
    %260 = vmatpush.msra.mxu0 0.0
    %261 = vmatpush.msra.mxu0 0.0
    %262 = vmatpush.msra.mxu0 %v242
    %263 = vmatmul.f32.gmra.mxu0 %v245
    %v264 = vpop.f32.mrf.mxu0
    %v265 = vadd.f32 0.0, %v264
    %266 = vdwg.mxu0
    %v267 = vmul.f32 %v239, %v200
    %v268 = vmul.f32 %v265, %v214
    %269 = vst.msk [vmem:[#allocation9] sm:$0xff] %vm111, %v267
    %270 = vst.msk [vmem:[#allocation9 + $0x8] sm:$0xff] %vm111, %v268
    %s271 = sld [smem:[#allocation8 + $0x1]]
    %v272 = vstv %s271
    %v273 = vmul.f32 %v272, %v103
    %274 = vrot.lane.b32.xlu0 %v96, 88
    %v275 = vpop.permute.xlu0 %274
    %276 = vrot.lane.b32.xlu0 %v91, 120
    %v277 = vpop.permute.xlu0 %276
    %v278 = vsel %vm111, %v275, 0
    %v280 = vsel %vm111, %v277, 0
    %282 = vmatpush.xpose.msra.mxu0 0.0
    %283 = vmatpush.xpose.msra.mxu0 0.0
    %284 = vmatpush.xpose.msra.mxu0 0.0
    %285 = vmatpush.xpose.msra.mxu0 0.0
    %286 = vmatpush.xpose.msra.mxu0 0.0
    %287 = vmatpush.xpose.msra.mxu0 0.0
    %288 = vmatpush.xpose.msra.mxu0 0.0
    %289 = vmatpush.xpose.msra.mxu0 0.0
    %290 = vmatpush.xpose.msra.mxu0 0.0
    %291 = vmatpush.xpose.msra.mxu0 0.0
    %292 = vmatpush.xpose.msra.mxu0 0.0
    %293 = vmatpush.xpose.msra.mxu0 0.0
    %294 = vmatpush.xpose.msra.mxu0 0.0
    %295 = vmatpush.xpose.msra.mxu0 0.0
    %296 = vmatpush.xpose.msra.mxu0 0.0
    %297 = vmatpush.xpose.msra.mxu0 %v280
    %298 = vmatmul.f32.gmra.mxu0 %v278
    %v299 = vpop.f32.mrf.mxu0
    %v300 = vadd.f32 %v273, %v299
    %301 = vdwg.mxu0
    %302 = vrot.lane.b32.xlu0 %v97, 88
    %v303 = vpop.permute.xlu0 %302
    %304 = vrot.lane.b32.xlu0 %v94, 120
    %v305 = vpop.permute.xlu0 %304
    %v306 = vsel %vm111, %v303, 0
    %v308 = vsel %vm111, %v305, 0
    %310 = vmatpush.xpose.msra.mxu0 0.0
    %311 = vmatpush.xpose.msra.mxu0 0.0
    %312 = vmatpush.xpose.msra.mxu0 0.0
    %313 = vmatpush.xpose.msra.mxu0 0.0
    %314 = vmatpush.xpose.msra.mxu0 0.0
    %315 = vmatpush.xpose.msra.mxu0 0.0
    %316 = vmatpush.xpose.msra.mxu0 0.0
    %317 = vmatpush.xpose.msra.mxu0 0.0
    %318 = vmatpush.xpose.msra.mxu0 0.0
    %319 = vmatpush.xpose.msra.mxu0 0.0
    %320 = vmatpush.xpose.msra.mxu0 0.0
    %321 = vmatpush.xpose.msra.mxu0 0.0
    %322 = vmatpush.xpose.msra.mxu0 0.0
    %323 = vmatpush.xpose.msra.mxu0 0.0
    %324 = vmatpush.xpose.msra.mxu0 0.0
    %325 = vmatpush.xpose.msra.mxu0 %v308
    %326 = vmatmul.f32.gmra.mxu0 %v306
    %v327 = vpop.f32.mrf.mxu0
    %v328 = vadd.f32 %v273, %v327
    %329 = vdwg.mxu0
    %v330 = vsel %vm166, %v300, -inf
    %v331 = vsel %vm166, %v328, -inf
    %v332 = vsel %vm111, %v330, -inf
    %333 = vmax.xlane.f32.xlu0 %v332
    %v334 = vpop.xlane.xlu0 %333
    %v335 = vsel %vm111, %v331, -inf
    %336 = vmax.xlane.f32.xlu0 %v335
    %v337 = vpop.xlane.xlu0 %336
    %v338 = vsub.f32 %v330, %v334
    %v339 = vsub.f32 %v331, %v337
    %v340 = vmul.f32 %v338, 1.442695
    %v341 = vpow.pop %v340
    %v342 = vmul.f32 %v339, 1.442695
    %v343 = vpow.pop %v342
    %v344 = vsel %vm111, %v341, 0.0
    %345 = vadd.xlane.f32.xlu0 %v344
    %v346 = vpop.xlane.xlu0 %345
    %v347 = vsel %vm111, %v343, 0.0
    %348 = vadd.xlane.f32.xlu0 %v347
    %v349 = vpop.xlane.xlu0 %348
    %v350 = vrcp.pop %v346
    %v351 = vmul.f32 %v346, %v350
    %v352 = vsub.f32 1.0, %v351
    %v353 = vmul.f32 %v350, %v352
    %v354 = vadd.f32 %v350, %v353
    %vm355 = vweird.f32 %v346
    %vm356 = vweird.f32 %v350
    %vm357 = vmor %vm355, %vm356
    %v358 = vsel %vm357, %v350, %v354
    %v359 = vand.u32 2147483647, %v346
    %vm360 = vcmp.eq.f32.partialorder %v359, 8.507059e+37
    %v361 = vand.u32 %v346, 2147483648
    %v362 = vor.u32 1.1754944e-38, %v361
    %v363 = vsel %vm360, %v362, %v358
    %v364 = vrcp.pop %v349
    %v365 = vmul.f32 %v349, %v364
    %v366 = vsub.f32 1.0, %v365
    %v367 = vmul.f32 %v364, %v366
    %v368 = vadd.f32 %v364, %v367
    %vm369 = vweird.f32 %v349
    %vm370 = vweird.f32 %v364
    %vm371 = vmor %vm369, %vm370
    %v372 = vsel %vm371, %v364, %v368
    %v373 = vand.u32 2147483647, %v349
    %vm374 = vcmp.eq.f32.partialorder %v373, 8.507059e+37
    %v375 = vand.u32 %v349, 2147483648
    %v376 = vor.u32 1.1754944e-38, %v375
    %v377 = vsel %vm374, %v376, %v372
    %378 = vrot.lane.b32.xlu0 %v91, 56
    %v379 = vpop.permute.xlu0 %378
    %v382 = vsel %vm111, %v341, 0
    %384 = vmatpush.msra.mxu0 0.0
    %385 = vmatpush.msra.mxu0 0.0
    %386 = vmatpush.msra.mxu0 0.0
    %387 = vmatpush.msra.mxu0 0.0
    %388 = vmatpush.msra.mxu0 0.0
    %389 = vmatpush.msra.mxu0 0.0
    %390 = vmatpush.msra.mxu0 0.0
    %391 = vmatpush.msra.mxu0 0.0
    %392 = vmatpush.msra.mxu0 0.0
    %393 = vmatpush.msra.mxu0 0.0
    %394 = vmatpush.msra.mxu0 0.0
    %395 = vmatpush.msra.mxu0 0.0
    %396 = vmatpush.msra.mxu0 0.0
    %397 = vmatpush.msra.mxu0 0.0
    %398 = vmatpush.msra.mxu0 0.0
    %399 = vmatpush.msra.mxu0 %v379
    %400 = vmatmul.f32.gmra.mxu0 %v382
    %v401 = vpop.f32.mrf.mxu0
    %v402 = vadd.f32 0.0, %v401
    %403 = vdwg.mxu0
    %404 = vrot.lane.b32.xlu0 %v94, 56
    %v405 = vpop.permute.xlu0 %404
    %v408 = vsel %vm111, %v343, 0
    %410 = vmatpush.msra.mxu0 0.0
    %411 = vmatpush.msra.mxu0 0.0
    %412 = vmatpush.msra.mxu0 0.0
    %413 = vmatpush.msra.mxu0 0.0
    %414 = vmatpush.msra.mxu0 0.0
    %415 = vmatpush.msra.mxu0 0.0
    %416 = vmatpush.msra.mxu0 0.0
    %417 = vmatpush.msra.mxu0 0.0
    %418 = vmatpush.msra.mxu0 0.0
    %419 = vmatpush.msra.mxu0 0.0
    %420 = vmatpush.msra.mxu0 0.0
    %421 = vmatpush.msra.mxu0 0.0
    %422 = vmatpush.msra.mxu0 0.0
    %423 = vmatpush.msra.mxu0 0.0
    %424 = vmatpush.msra.mxu0 0.0
    %425 = vmatpush.msra.mxu0 %v405
    %426 = vmatmul.f32.gmra.mxu0 %v408
    %v427 = vpop.f32.mrf.mxu0
    %v428 = vadd.f32 0.0, %v427
    %429 = vdwg.mxu0
    %v430 = vmul.f32 %v402, %v363
    %v431 = vmul.f32 %v428, %v377
    %434 = vrot.lane.b32.xlu0 %v430, 8
    %v435 = vpop.permute.xlu0 %434
    %436 = vrot.lane.b32.xlu0 %v431, 8
    %v437 = vpop.permute.xlu0 %436
    %vm440 = vcmask 130112
    %441 = vst.msk [vmem:[#allocation9] sm:$0xff] %vm440, %v435
    %442 = vst.msk [vmem:[#allocation9 + $0x8] sm:$0xff] %vm440, %v437
    %s443 = sld [smem:[#allocation8 + $0x2]]
    %v444 = vstv %s443
    %v445 = vmul.f32 %v444, %v103
    %446 = vrot.lane.b32.xlu0 %v96, 80
    %v447 = vpop.permute.xlu0 %446
    %448 = vrot.lane.b32.xlu0 %v91, 112
    %v449 = vpop.permute.xlu0 %448
    %v450 = vsel %vm111, %v447, 0
    %v452 = vsel %vm111, %v449, 0
    %454 = vmatpush.xpose.msra.mxu0 0.0
    %455 = vmatpush.xpose.msra.mxu0 0.0
    %456 = vmatpush.xpose.msra.mxu0 0.0
    %457 = vmatpush.xpose.msra.mxu0 0.0
    %458 = vmatpush.xpose.msra.mxu0 0.0
    %459 = vmatpush.xpose.msra.mxu0 0.0
    %460 = vmatpush.xpose.msra.mxu0 0.0
    %461 = vmatpush.xpose.msra.mxu0 0.0
    %462 = vmatpush.xpose.msra.mxu0 0.0
    %463 = vmatpush.xpose.msra.mxu0 0.0
    %464 = vmatpush.xpose.msra.mxu0 0.0
    %465 = vmatpush.xpose.msra.mxu0 0.0
    %466 = vmatpush.xpose.msra.mxu0 0.0
    %467 = vmatpush.xpose.msra.mxu0 0.0
    %468 = vmatpush.xpose.msra.mxu0 0.0
    %469 = vmatpush.xpose.msra.mxu0 %v452
    %470 = vmatmul.f32.gmra.mxu0 %v450
    %v471 = vpop.f32.mrf.mxu0
    %v472 = vadd.f32 %v445, %v471
    %473 = vdwg.mxu0
    %474 = vrot.lane.b32.xlu0 %v97, 80
    %v475 = vpop.permute.xlu0 %474
    %476 = vrot.lane.b32.xlu0 %v94, 112
    %v477 = vpop.permute.xlu0 %476
    %v478 = vsel %vm111, %v475, 0
    %v480 = vsel %vm111, %v477, 0
    %482 = vmatpush.xpose.msra.mxu0 0.0
    %483 = vmatpush.xpose.msra.mxu0 0.0
    %484 = vmatpush.xpose.msra.mxu0 0.0
    %485 = vmatpush.xpose.msra.mxu0 0.0
    %486 = vmatpush.xpose.msra.mxu0 0.0
    %487 = vmatpush.xpose.msra.mxu0 0.0
    %488 = vmatpush.xpose.msra.mxu0 0.0
    %489 = vmatpush.xpose.msra.mxu0 0.0
    %490 = vmatpush.xpose.msra.mxu0 0.0
    %491 = vmatpush.xpose.msra.mxu0 0.0
    %492 = vmatpush.xpose.msra.mxu0 0.0
    %493 = vmatpush.xpose.msra.mxu0 0.0
    %494 = vmatpush.xpose.msra.mxu0 0.0
    %495 = vmatpush.xpose.msra.mxu0 0.0
    %496 = vmatpush.xpose.msra.mxu0 0.0
    %497 = vmatpush.xpose.msra.mxu0 %v480
    %498 = vmatmul.f32.gmra.mxu0 %v478
    %v499 = vpop.f32.mrf.mxu0
    %v500 = vadd.f32 %v445, %v499
    %501 = vdwg.mxu0
    %v502 = vsel %vm166, %v472, -inf
    %v503 = vsel %vm166, %v500, -inf
    %v504 = vsel %vm111, %v502, -inf
    %505 = vmax.xlane.f32.xlu0 %v504
    %v506 = vpop.xlane.xlu0 %505
    %v507 = vsel %vm111, %v503, -inf
    %508 = vmax.xlane.f32.xlu0 %v507
    %v509 = vpop.xlane.xlu0 %508
    %v510 = vsub.f32 %v502, %v506
    %v511 = vsub.f32 %v503, %v509
    %v512 = vmul.f32 %v510, 1.442695
    %v513 = vpow.pop %v512
    %v514 = vmul.f32 %v511, 1.442695
    %v515 = vpow.pop %v514
    %v516 = vsel %vm111, %v513, 0.0
    %517 = vadd.xlane.f32.xlu0 %v516
    %v518 = vpop.xlane.xlu0 %517
    %v519 = vsel %vm111, %v515, 0.0
    %520 = vadd.xlane.f32.xlu0 %v519
    %v521 = vpop.xlane.xlu0 %520
    %v522 = vrcp.pop %v518
    %v523 = vmul.f32 %v518, %v522
    %v524 = vsub.f32 1.0, %v523
    %v525 = vmul.f32 %v522, %v524
    %v526 = vadd.f32 %v522, %v525
    %vm527 = vweird.f32 %v518
    %vm528 = vweird.f32 %v522
    %vm529 = vmor %vm527, %vm528
    %v530 = vsel %vm529, %v522, %v526
    %v531 = vand.u32 2147483647, %v518
    %vm532 = vcmp.eq.f32.partialorder %v531, 8.507059e+37
    %v533 = vand.u32 %v518, 2147483648
    %v534 = vor.u32 1.1754944e-38, %v533
    %v535 = vsel %vm532, %v534, %v530
    %v536 = vrcp.pop %v521
    %v537 = vmul.f32 %v521, %v536
    %v538 = vsub.f32 1.0, %v537
    %v539 = vmul.f32 %v536, %v538
    %v540 = vadd.f32 %v536, %v539
    %vm541 = vweird.f32 %v521
    %vm542 = vweird.f32 %v536
    %vm543 = vmor %vm541, %vm542
    %v544 = vsel %vm543, %v536, %v540
    %v545 = vand.u32 2147483647, %v521
    %vm546 = vcmp.eq.f32.partialorder %v545, 8.507059e+37
    %v547 = vand.u32 %v521, 2147483648
    %v548 = vor.u32 1.1754944e-38, %v547
    %v549 = vsel %vm546, %v548, %v544
    %550 = vrot.lane.b32.xlu0 %v91, 48
    %v551 = vpop.permute.xlu0 %550
    %v554 = vsel %vm111, %v513, 0
    %556 = vmatpush.msra.mxu0 0.0
    %557 = vmatpush.msra.mxu0 0.0
    %558 = vmatpush.msra.mxu0 0.0
    %559 = vmatpush.msra.mxu0 0.0
    %560 = vmatpush.msra.mxu0 0.0
    %561 = vmatpush.msra.mxu0 0.0
    %562 = vmatpush.msra.mxu0 0.0
    %563 = vmatpush.msra.mxu0 0.0
    %564 = vmatpush.msra.mxu0 0.0
    %565 = vmatpush.msra.mxu0 0.0
    %566 = vmatpush.msra.mxu0 0.0
    %567 = vmatpush.msra.mxu0 0.0
    %568 = vmatpush.msra.mxu0 0.0
    %569 = vmatpush.msra.mxu0 0.0
    %570 = vmatpush.msra.mxu0 0.0
    %571 = vmatpush.msra.mxu0 %v551
    %572 = vmatmul.f32.gmra.mxu0 %v554
    %v573 = vpop.f32.mrf.mxu0
    %v574 = vadd.f32 0.0, %v573
    %575 = vdwg.mxu0
    %576 = vrot.lane.b32.xlu0 %v94, 48
    %v577 = vpop.permute.xlu0 %576
    %v580 = vsel %vm111, %v515, 0
    %582 = vmatpush.msra.mxu0 0.0
    %583 = vmatpush.msra.mxu0 0.0
    %584 = vmatpush.msra.mxu0 0.0
    %585 = vmatpush.msra.mxu0 0.0
    %586 = vmatpush.msra.mxu0 0.0
    %587 = vmatpush.msra.mxu0 0.0
    %588 = vmatpush.msra.mxu0 0.0
    %589 = vmatpush.msra.mxu0 0.0
    %590 = vmatpush.msra.mxu0 0.0
    %591 = vmatpush.msra.mxu0 0.0
    %592 = vmatpush.msra.mxu0 0.0
    %593 = vmatpush.msra.mxu0 0.0
    %594 = vmatpush.msra.mxu0 0.0
    %595 = vmatpush.msra.mxu0 0.0
    %596 = vmatpush.msra.mxu0 0.0
    %597 = vmatpush.msra.mxu0 %v577
    %598 = vmatmul.f32.gmra.mxu0 %v580
    %v599 = vpop.f32.mrf.mxu0
    %v600 = vadd.f32 0.0, %v599
    %601 = vdwg.mxu0
    %v602 = vmul.f32 %v574, %v535
    %v603 = vmul.f32 %v600, %v549
    %606 = vrot.lane.b32.xlu0 %v602, 16
    %v607 = vpop.permute.xlu0 %606
    %608 = vrot.lane.b32.xlu0 %v603, 16
    %v609 = vpop.permute.xlu0 %608
    %vm612 = vcmask 195712
    %613 = vst.msk [vmem:[#allocation9] sm:$0xff] %vm612, %v607
    %614 = vst.msk [vmem:[#allocation9 + $0x8] sm:$0xff] %vm612, %v609
    %s615 = sld [smem:[#allocation8 + $0x3]]
    %v616 = vstv %s615
    %v617 = vmul.f32 %v616, %v103
    %618 = vrot.lane.b32.xlu0 %v96, 72
    %v619 = vpop.permute.xlu0 %618
    %620 = vrot.lane.b32.xlu0 %v91, 104
    %v621 = vpop.permute.xlu0 %620
    %v622 = vsel %vm111, %v619, 0
    %v624 = vsel %vm111, %v621, 0
    %626 = vmatpush.xpose.msra.mxu0 0.0
    %627 = vmatpush.xpose.msra.mxu0 0.0
    %628 = vmatpush.xpose.msra.mxu0 0.0
    %629 = vmatpush.xpose.msra.mxu0 0.0
    %630 = vmatpush.xpose.msra.mxu0 0.0
    %631 = vmatpush.xpose.msra.mxu0 0.0
    %632 = vmatpush.xpose.msra.mxu0 0.0
    %633 = vmatpush.xpose.msra.mxu0 0.0
    %634 = vmatpush.xpose.msra.mxu0 0.0
    %635 = vmatpush.xpose.msra.mxu0 0.0
    %636 = vmatpush.xpose.msra.mxu0 0.0
    %637 = vmatpush.xpose.msra.mxu0 0.0
    %638 = vmatpush.xpose.msra.mxu0 0.0
    %639 = vmatpush.xpose.msra.mxu0 0.0
    %640 = vmatpush.xpose.msra.mxu0 0.0
    %641 = vmatpush.xpose.msra.mxu0 %v624
    %642 = vmatmul.f32.gmra.mxu0 %v622
    %v643 = vpop.f32.mrf.mxu0
    %v644 = vadd.f32 %v617, %v643
    %645 = vdwg.mxu0
    %646 = vrot.lane.b32.xlu0 %v97, 72
    %v647 = vpop.permute.xlu0 %646
    %648 = vrot.lane.b32.xlu0 %v94, 104
    %v649 = vpop.permute.xlu0 %648
    %v650 = vsel %vm111, %v647, 0
    %v652 = vsel %vm111, %v649, 0
    %654 = vmatpush.xpose.msra.mxu0 0.0
    %655 = vmatpush.xpose.msra.mxu0 0.0
    %656 = vmatpush.xpose.msra.mxu0 0.0
    %657 = vmatpush.xpose.msra.mxu0 0.0
    %658 = vmatpush.xpose.msra.mxu0 0.0
    %659 = vmatpush.xpose.msra.mxu0 0.0
    %660 = vmatpush.xpose.msra.mxu0 0.0
    %661 = vmatpush.xpose.msra.mxu0 0.0
    %662 = vmatpush.xpose.msra.mxu0 0.0
    %663 = vmatpush.xpose.msra.mxu0 0.0
    %664 = vmatpush.xpose.msra.mxu0 0.0
    %665 = vmatpush.xpose.msra.mxu0 0.0
    %666 = vmatpush.xpose.msra.mxu0 0.0
    %667 = vmatpush.xpose.msra.mxu0 0.0
    %668 = vmatpush.xpose.msra.mxu0 0.0
    %669 = vmatpush.xpose.msra.mxu0 %v652
    %670 = vmatmul.f32.gmra.mxu0 %v650
    %v671 = vpop.f32.mrf.mxu0
    %v672 = vadd.f32 %v617, %v671
    %673 = vdwg.mxu0
    %v674 = vsel %vm166, %v644, -inf
    %v675 = vsel %vm166, %v672, -inf
    %v676 = vsel %vm111, %v674, -inf
    %677 = vmax.xlane.f32.xlu0 %v676
    %v678 = vpop.xlane.xlu0 %677
    %v679 = vsel %vm111, %v675, -inf
    %680 = vmax.xlane.f32.xlu0 %v679
    %v681 = vpop.xlane.xlu0 %680
    %v682 = vsub.f32 %v674, %v678
    %v683 = vsub.f32 %v675, %v681
    %v684 = vmul.f32 %v682, 1.442695
    %v685 = vpow.pop %v684
    %v686 = vmul.f32 %v683, 1.442695
    %v687 = vpow.pop %v686
    %v688 = vsel %vm111, %v685, 0.0
    %689 = vadd.xlane.f32.xlu0 %v688
    %v690 = vpop.xlane.xlu0 %689
    %v691 = vsel %vm111, %v687, 0.0
    %692 = vadd.xlane.f32.xlu0 %v691
    %v693 = vpop.xlane.xlu0 %692
    %v694 = vrcp.pop %v690
    %v695 = vmul.f32 %v690, %v694
    %v696 = vsub.f32 1.0, %v695
    %v697 = vmul.f32 %v694, %v696
    %v698 = vadd.f32 %v694, %v697
    %vm699 = vweird.f32 %v690
    %vm700 = vweird.f32 %v694
    %vm701 = vmor %vm699, %vm700
    %v702 = vsel %vm701, %v694, %v698
    %v703 = vand.u32 2147483647, %v690
    %vm704 = vcmp.eq.f32.partialorder %v703, 8.507059e+37
    %v705 = vand.u32 %v690, 2147483648
    %v706 = vor.u32 1.1754944e-38, %v705
    %v707 = vsel %vm704, %v706, %v702
    %v708 = vrcp.pop %v693
    %v709 = vmul.f32 %v693, %v708
    %v710 = vsub.f32 1.0, %v709
    %v711 = vmul.f32 %v708, %v710
    %v712 = vadd.f32 %v708, %v711
    %vm713 = vweird.f32 %v693
    %vm714 = vweird.f32 %v708
    %vm715 = vmor %vm713, %vm714
    %v716 = vsel %vm715, %v708, %v712
    %v717 = vand.u32 2147483647, %v693
    %vm718 = vcmp.eq.f32.partialorder %v717, 8.507059e+37
    %v719 = vand.u32 %v693, 2147483648
    %v720 = vor.u32 1.1754944e-38, %v719
    %v721 = vsel %vm718, %v720, %v716
    %722 = vrot.lane.b32.xlu0 %v91, 40
    %v723 = vpop.permute.xlu0 %722
    %v726 = vsel %vm111, %v685, 0
    %728 = vmatpush.msra.mxu0 0.0
    %729 = vmatpush.msra.mxu0 0.0
    %730 = vmatpush.msra.mxu0 0.0
    %731 = vmatpush.msra.mxu0 0.0
    %732 = vmatpush.msra.mxu0 0.0
    %733 = vmatpush.msra.mxu0 0.0
    %734 = vmatpush.msra.mxu0 0.0
    %735 = vmatpush.msra.mxu0 0.0
    %736 = vmatpush.msra.mxu0 0.0
    %737 = vmatpush.msra.mxu0 0.0
    %738 = vmatpush.msra.mxu0 0.0
    %739 = vmatpush.msra.mxu0 0.0
    %740 = vmatpush.msra.mxu0 0.0
    %741 = vmatpush.msra.mxu0 0.0
    %742 = vmatpush.msra.mxu0 0.0
    %743 = vmatpush.msra.mxu0 %v723
    %744 = vmatmul.f32.gmra.mxu0 %v726
    %v745 = vpop.f32.mrf.mxu0
    %v746 = vadd.f32 0.0, %v745
    %747 = vdwg.mxu0
    %748 = vrot.lane.b32.xlu0 %v94, 40
    %v749 = vpop.permute.xlu0 %748
    %v752 = vsel %vm111, %v687, 0
    %754 = vmatpush.msra.mxu0 0.0
    %755 = vmatpush.msra.mxu0 0.0
    %756 = vmatpush.msra.mxu0 0.0
    %757 = vmatpush.msra.mxu0 0.0
    %758 = vmatpush.msra.mxu0 0.0
    %759 = vmatpush.msra.mxu0 0.0
    %760 = vmatpush.msra.mxu0 0.0
    %761 = vmatpush.msra.mxu0 0.0
    %762 = vmatpush.msra.mxu0 0.0
    %763 = vmatpush.msra.mxu0 0.0
    %764 = vmatpush.msra.mxu0 0.0
    %765 = vmatpush.msra.mxu0 0.0
    %766 = vmatpush.msra.mxu0 0.0
    %767 = vmatpush.msra.mxu0 0.0
    %768 = vmatpush.msra.mxu0 0.0
    %769 = vmatpush.msra.mxu0 %v749
    %770 = vmatmul.f32.gmra.mxu0 %v752
    %v771 = vpop.f32.mrf.mxu0
    %v772 = vadd.f32 0.0, %v771
    %773 = vdwg.mxu0
    %v774 = vmul.f32 %v746, %v707
    %v775 = vmul.f32 %v772, %v721
    %778 = vrot.lane.b32.xlu0 %v774, 24
    %v779 = vpop.permute.xlu0 %778
    %780 = vrot.lane.b32.xlu0 %v775, 24
    %v781 = vpop.permute.xlu0 %780
    %vm784 = vcmask 261312
    %785 = vst.msk [vmem:[#allocation9] sm:$0xff] %vm784, %v779
    %786 = vst.msk [vmem:[#allocation9 + $0x8] sm:$0xff] %vm784, %v781
    // Predicated region
    $region26: #{alibi_mha_forward.1} parent=1 // pred_check
      _
    $region27: #{alibi_mha_forward.1} parent=1 // pred_check_branch
      %788 = sbr.rel (0) target = $region29
    $region28: #{alibi_mha_forward.1} parent=1 // pred_region
      %790 = vsyncadd [#allocation4], 0
      %s791 = sshll.u32 [#allocation9], 4
      %s792 = int_to_ptr.vmem [resolvable:$true] %s791
      %s793 = sshll.u32 %s3, 4
      %s794 = int_to_ptr.hbm [resolvable:$true] %s793
      %799 = dma.vmem_to_hbm [thread:$0]  %s792, 256, %s794, [#allocation4], 128, 128, 8
    $region29: #{alibi_mha_forward.1} parent=1 // pred_fallthru
      _
    // Predicated region
    $region30: #{alibi_mha_forward.1} parent=1 // pred_check
      _
    $region31: #{alibi_mha_forward.1} parent=1 // pred_check_branch
      %801 = sbr.rel (0) target = $region33
    $region32: #{alibi_mha_forward.1} parent=1 // pred_region
      %803 = dma.done [#allocation4], 256
    $region33: #{alibi_mha_forward.1} parent=1 // pred_fallthru
      _
    %804 = vsyncpa [#allocation3], 1
    %805 = vsyncpa [#allocation7], 1
    %806 = vsyncpa [#allocation4], 1
    %807 = vsyncpa [#allocation5], 1

</llo_original>
